<compile_context>
chip_gen: v7x
topology: tpu7x:2x2x1
jax: 0.10.0
libtpu: 0.0.40
codegen_flags: <defaults>
</compile_context>

<pallas_src>
import functools

import jax
import jax.numpy as jnp
from jax import lax
from jax.experimental import pallas as pl
from jax.experimental.pallas import tpu as pltpu


BN_EPS = 1e-5          # PyTorch BatchNorm1d default
F_IN = 13              # input features
H1, H1P = 10, 16       # layer-1 width (real / sublane-padded)
H2, H2P = 5, 8         # layer-2 width (real / sublane-padded)

# ---------------------------------------------------------------------------
# Packed parameter slab: ONE (48, 16) f32 array -> a single resident DMA.
# Every sub-tensor starts at a sublane offset that is a multiple of 8, the
# weight matrices sit at lane offset 0, and all padded rows/cols are zero so
# they contribute nothing downstream.
#   rows  0:16, cols 0:13 : W1   (10, 13) zero-padded to (16, 16)
#   rows 16:24, cols 0:16 : W2   (5, 10)  zero-padded to (8, 16)
#   rows 24:40, col 0/1/2 : b1 / gamma1 / beta1   (16-row padded columns)
#   rows 40:48, col 0/1/2 : b2 / gamma2 / beta2   (8-row padded columns)
#   rows 40:48, col 3     : W3^T (5,) zero-padded to (8, 1)
#   row  40   , col 4     : b3
# ---------------------------------------------------------------------------
P_ROWS, P_COLS = 48, 16


def pack_params(params):
    p = jnp.zeros((P_ROWS, P_COLS), jnp.float32)
    p = p.at[0:H1, 0:F_IN].set(params["w1"])
    p = p.at[16:16 + H2, 0:H1].set(params["w2"])
    p = p.at[24:24 + H1, 0].set(params["b1"])
    p = p.at[24:24 + H1, 1].set(params["g1"])
    p = p.at[24:24 + H1, 2].set(params["be1"])
    p = p.at[40:40 + H2, 0].set(params["b2"])
    p = p.at[40:40 + H2, 1].set(params["g2"])
    p = p.at[40:40 + H2, 2].set(params["be2"])
    p = p.at[40:40 + H2, 3].set(params["w3"][0, :])
    p = p.at[40, 4].set(params["b3"][0])
    return p


def model1_kernel(x_ref, p_ref, o_ref, s1_ref, q1_ref, s2_ref, q2_ref, *, n_valid):
    """Three-phase kernel over grid (phase, batch_tile).

    The tile axis is the fastest grid axis, so every tile of phase k completes
    before phase k+1 starts; the moment scratches persist across the grid.
    """
    phase = pl.program_id(0)
    i = pl.program_id(1)
    tile_n = x_ref.shape[0]
    inv_n = jnp.float32(1.0 / n_valid)

    # ---- parameters (resident slab; 8-sublane-aligned static slices) ----
    w1 = p_ref[0:H1P, 0:F_IN]        # (16, 13)
    w2 = p_ref[16:24, 0:H1P]         # (8, 16)
    b1 = p_ref[24:40, 0:1]           # (16, 1)
    g1 = p_ref[24:40, 1:2]
    be1 = p_ref[24:40, 2:3]
    b2 = p_ref[40:48, 0:1]           # (8, 1)
    g2 = p_ref[40:48, 1:2]
    be2 = p_ref[40:48, 2:3]
    w3c = p_ref[40:48, 3:4]          # (8, 1) = W3^T
    b3 = p_ref[40:41, 4:5]           # (1, 1)

    # Mask of valid batch lanes in this tile (zero-padded tail rows must not
    # bias the global BN statistics).
    lane = lax.broadcasted_iota(jnp.int32, (1, tile_n), 1)
    mask = ((i * tile_n + lane) < n_valid).astype(jnp.float32)   # (1, tile_n)

    x_blk = x_ref[...]               # (tile_n, 13) straight from HBM, no transpose copy

    # Layer 1 pre-activation in feature-major layout: contract the feature axis
    # of BOTH operands (A @ B^T on the MXU) so the batch lands lane-dense
    # without materializing x^T anywhere.
    h1 = lax.dot_general(w1, x_blk, (((1,), (1,)), ((), ())),
                         preferred_element_type=jnp.float32) + b1   # (16, tile_n)

    def bn_relu(h, s, ssq, gamma, beta):
        # Training-mode BatchNorm1d with *global* batch moments (biased variance).
        mean = s * inv_n
        var = jnp.maximum(ssq * inv_n - mean * mean, 0.0)
        h_hat = (h - mean) * lax.rsqrt(var + BN_EPS)
        return jnp.maximum(h_hat * gamma + beta, 0.0)

    def layer2(h1_act):
        return jnp.dot(w2, h1_act, preferred_element_type=jnp.float32) + b2  # (8, tile_n)

    @pl.when(jnp.logical_and(phase == 0, i == 0))
    def _init():
        s1_ref[...] = jnp.zeros_like(s1_ref)
        q1_ref[...] = jnp.zeros_like(q1_ref)
        s2_ref[...] = jnp.zeros_like(s2_ref)
        q2_ref[...] = jnp.zeros_like(q2_ref)

    @pl.when(phase == 0)
    def _phase0():                               # accumulate BN1 moments
        h1m = h1 * mask
        s1_ref[...] += jnp.sum(h1m, axis=-1, keepdims=True)
        q1_ref[...] += jnp.sum(h1m * h1, axis=-1, keepdims=True)

    @pl.when(phase == 1)
    def _phase1():                               # accumulate BN2 moments
        h1a = bn_relu(h1, s1_ref[...], q1_ref[...], g1, be1)
        h2 = layer2(h1a)
        h2m = h2 * mask
        s2_ref[...] += jnp.sum(h2m, axis=-1, keepdims=True)
        q2_ref[...] += jnp.sum(h2m * h2, axis=-1, keepdims=True)

    @pl.when(phase == 2)
    def _phase2():                               # full forward + output
        h1a = bn_relu(h1, s1_ref[...], q1_ref[...], g1, be1)
        h2 = layer2(h1a)
        h2a = bn_relu(h2, s2_ref[...], q2_ref[...], g2, be2)
        # Layer 3 (5 -> 1) as a broadcast multiply + 8-wide sublane reduce on
        # the VPU/XLU (no MXU pass for a single output row); lane-dense (1, tile_n).
        h3 = jnp.sum(w3c * h2a, axis=0, keepdims=True) + b3
        o_ref[...] = jax.nn.sigmoid(h3)


def _round_up(a: int, b: int) -> int:
    return (a + b - 1) // b * b


def model1_forward(x, packed_params, *, tile_n=4096, vmem_limit_bytes=None):
    """x: (N, 13) float32 -> (N, 1) float32 (PyTorch Model1.forward, train mode)."""
    n, f = x.shape
    assert f == F_IN, f

    # Tile policy: single full block for small batches; otherwise a lane-dense
    # multiple of 128 so output stores stay unmasked and the BlockSpec pipeline
    # double-buffers the x DMA.  4096-row f32 tiles are ~2 MiB each (lane-padded
    # in VMEM), well inside even v5e's 16 MiB default scoped-VMEM budget.
    if n <= tile_n:
        tile = _round_up(max(n, 1), 8)
    else:
        tile = _round_up(tile_n, 128)
    padded_n = _round_up(n, tile)
    if padded_n != n:
        # Zero-pad the ragged tail; the in-kernel lane mask keeps the padding out
        # of the BN statistics.  Pass N as a multiple of tile_n to skip this copy.
        x = jnp.pad(x, ((0, padded_n - n), (0, 0)))
    num_tiles = padded_n // tile

    compiler_kwargs = dict(
        # Both grid axes carry a sequential dependency through the BN moment
        # scratch, so they must be "arbitrary".
        # TODO(synk): on v7x (2 TCs) a per-core split of the tile axis with
        # per-core partial moments combined via VMEM_SHARED + core_barrier would
        # recover megacore parallelism; unnecessary at these sizes.
        dimension_semantics=("arbitrary", "arbitrary"),
    )
    if vmem_limit_bytes is not None:
        compiler_kwargs["vmem_limit_bytes"] = vmem_limit_bytes

    out = pl.pallas_call(
        functools.partial(model1_kernel, n_valid=n),
        out_shape=jax.ShapeDtypeStruct((1, padded_n), jnp.float32),
        grid=(3, num_tiles),                                       # (phase, batch tile)
        in_specs=[
            pl.BlockSpec((tile, F_IN), lambda p, i: (i, 0)),       # batch-major x, no wrapper transpose
            pl.BlockSpec((P_ROWS, P_COLS), lambda p, i: (0, 0)),   # resident packed-parameter slab
        ],
        out_specs=pl.BlockSpec((1, tile), lambda p, i: (0, i)),    # lane-dense output row
        scratch_shapes=[
            pltpu.VMEM((H1P, 1), jnp.float32),   # sum(h1_pre)
            pltpu.VMEM((H1P, 1), jnp.float32),   # sum(h1_pre^2)
            pltpu.VMEM((H2P, 1), jnp.float32),   # sum(h2_pre)
            pltpu.VMEM((H2P, 1), jnp.float32),   # sum(h2_pre^2)
        ],
        compiler_params=pltpu.CompilerParams(**compiler_kwargs),
    )(x, packed_params)

    # (1, N) lane-dense kernel output -> module's (N, 1) contract (free reshape).
    return out[:, :n].T


def init_params(key):
    """Deterministic init mirroring nn.Linear (U(-1/sqrt(fan_in), 1/sqrt(fan_in)))
    and nn.BatchNorm1d (gamma=1, beta=0). Weights stored (out, in) like PyTorch."""
    ks = jax.random.split(key, 6)

    def linear(kw, kb, fan_in, fan_out):
        bound = 1.0 / jnp.sqrt(jnp.float32(fan_in))
        w = jax.random.uniform(kw, (fan_out, fan_in), jnp.float32, -bound, bound)
        b = jax.random.uniform(kb, (fan_out,), jnp.float32, -bound, bound)
        return w, b

    w1, b1 = linear(ks[0], ks[1], 13, 10)
    w2, b2 = linear(ks[2], ks[3], 10, 5)
    w3, b3 = linear(ks[4], ks[5], 5, 1)

    return dict(
        w1=w1, b1=b1, w2=w2, b2=b2, w3=w3, b3=b3,
        g1=jnp.ones((10,), jnp.float32), be1=jnp.zeros((10,), jnp.float32),
        g2=jnp.ones((5,), jnp.float32), be2=jnp.zeros((5,), jnp.float32),
    )


def model1_reference(x, params):
    """Pure-JAX reference (batch-major layout) for correctness check."""
    def bn_relu(h, gamma, beta):
        mean = jnp.mean(h, axis=0, keepdims=True)
        var = jnp.mean((h - mean) ** 2, axis=0, keepdims=True)
        h_hat = (h - mean) * lax.rsqrt(var + BN_EPS)
        return jnp.maximum(h_hat * gamma + beta, 0.0)

    h1 = x @ params["w1"].T + params["b1"]
    h1 = bn_relu(h1, params["g1"], params["be1"])
    h2 = h1 @ params["w2"].T + params["b2"]
    h2 = bn_relu(h2, params["g2"], params["be2"])
    h3 = h2 @ params["w3"].T + params["b3"]
    return jax.nn.sigmoid(h3)


if __name__ == "__main__":
    key = jax.random.PRNGKey(0)
    k_param, k_x1, k_x2 = jax.random.split(key, 3)

    params = init_params(k_param)
    packed = pack_params(params)                              # one-time host-side packing

    # Small batch, single-tile path.
    x = jax.random.normal(k_x1, (8, 13), dtype=jnp.float32)   # batch=8, features=13
    out = jax.block_until_ready(model1_forward(x, packed))
    ref = model1_reference(x, params)
    assert out.shape == (8, 1), out.shape
    assert jnp.allclose(out, ref, atol=1e-5, rtol=1e-4), (out, ref)

    # Ragged multi-tile path (exercises the pipelined grid + BN lane masking).
    x2 = jax.random.normal(k_x2, (300, 13), dtype=jnp.float32)
    out2 = jax.block_until_ready(model1_forward(x2, packed, tile_n=128))
    ref2 = model1_reference(x2, params)
    assert out2.shape == (300, 1), out2.shape
    assert jnp.allclose(out2, ref2, atol=1e-5, rtol=1e-4), (out2, ref2)

    print("KERNEL_OK")
</pallas_src>

<mosaic_0001>
module attributes {stable_mosaic.version = 11 : i64} {
  func.func @model1_kernel(%arg0: i32, %arg1: i32, %arg2: memref<8x13xf32, #tpu.memory_space<vmem>>, %arg3: memref<48x16xf32, #tpu.memory_space<vmem>>, %arg4: memref<1x8xf32, #tpu.memory_space<vmem>>, %arg5: memref<16x1xf32, #tpu.memory_space<vmem>>, %arg6: memref<16x1xf32, #tpu.memory_space<vmem>>, %arg7: memref<8x1xf32, #tpu.memory_space<vmem>>, %arg8: memref<8x1xf32, #tpu.memory_space<vmem>>) attributes {dimension_semantics = [#tpu.dimension_semantics<arbitrary>, #tpu.dimension_semantics<arbitrary>], iteration_bounds = array<i64: 3, 1>, scalar_prefetch = 0 : i64, scratch_operands = 4 : i64, tpu.core_type = #tpu.core_type<tc>, window_params = [{transform_indices = @transform_0, window_bounds = array<i64: 8, 13>}, {pipeline_mode = #tpu.pipeline_mode<synchronous>, transform_indices = @transform_1, window_bounds = array<i64: 48, 16>}, {transform_indices = @transform_2, window_bounds = array<i64: 1, 8>}]} {
    %c0 = arith.constant 0 : index
    %c0_0 = arith.constant 0 : index
    %0 = vector.load %arg3[%c0, %c0_0] : memref<48x16xf32, #tpu.memory_space<vmem>>, vector<16x13xf32>
    %c16 = arith.constant 16 : index
    %c0_1 = arith.constant 0 : index
    %1 = vector.load %arg3[%c16, %c0_1] : memref<48x16xf32, #tpu.memory_space<vmem>>, vector<8x16xf32>
    %c24 = arith.constant 24 : index
    %c0_2 = arith.constant 0 : index
    %2 = vector.load %arg3[%c24, %c0_2] : memref<48x16xf32, #tpu.memory_space<vmem>>, vector<16x1xf32>
    %c24_3 = arith.constant 24 : index
    %c1 = arith.constant 1 : index
    %3 = vector.load %arg3[%c24_3, %c1] : memref<48x16xf32, #tpu.memory_space<vmem>>, vector<16x1xf32>
    %c24_4 = arith.constant 24 : index
    %c2 = arith.constant 2 : index
    %4 = vector.load %arg3[%c24_4, %c2] : memref<48x16xf32, #tpu.memory_space<vmem>>, vector<16x1xf32>
    %c40 = arith.constant 40 : index
    %c0_5 = arith.constant 0 : index
    %5 = vector.load %arg3[%c40, %c0_5] : memref<48x16xf32, #tpu.memory_space<vmem>>, vector<8x1xf32>
    %c40_6 = arith.constant 40 : index
    %c1_7 = arith.constant 1 : index
    %6 = vector.load %arg3[%c40_6, %c1_7] : memref<48x16xf32, #tpu.memory_space<vmem>>, vector<8x1xf32>
    %c40_8 = arith.constant 40 : index
    %c2_9 = arith.constant 2 : index
    %7 = vector.load %arg3[%c40_8, %c2_9] : memref<48x16xf32, #tpu.memory_space<vmem>>, vector<8x1xf32>
    %c40_10 = arith.constant 40 : index
    %c3 = arith.constant 3 : index
    %8 = vector.load %arg3[%c40_10, %c3] : memref<48x16xf32, #tpu.memory_space<vmem>>, vector<8x1xf32>
    %c40_11 = arith.constant 40 : index
    %c4 = arith.constant 4 : index
    %9 = vector.load %arg3[%c40_11, %c4] : memref<48x16xf32, #tpu.memory_space<vmem>>, vector<1x1xf32>
    %10 = tpu.iota {dimensions = array<i32: 1>} : vector<1x8xi32>
    %c8_i32 = arith.constant 8 : i32
    %11 = arith.muli %arg1, %c8_i32 : i32
    %12 = vector.broadcast %11 : i32 to vector<1x8xi32>
    %13 = arith.addi %12, %10 : vector<1x8xi32>
    %c8_i32_12 = arith.constant 8 : i32
    %14 = vector.broadcast %c8_i32_12 : i32 to vector<1x8xi32>
    %15 = arith.cmpi slt, %13, %14 : vector<1x8xi32>
    %16 = arith.extui %15 : vector<1x8xi1> to vector<1x8xi32>
    %17 = arith.sitofp %16 : vector<1x8xi32> to vector<1x8xf32>
    %c0_13 = arith.constant 0 : index
    %c0_14 = arith.constant 0 : index
    %18 = vector.load %arg2[%c0_13, %c0_14] : memref<8x13xf32, #tpu.memory_space<vmem>>, vector<8x13xf32>
    %cst = arith.constant dense<0.000000e+00> : vector<16x8xf32>
    %19 = tpu.matmul %0, %18, %cst {dimension_numbers = #tpu.dot_dimension_numbers<[1], [1], [0], [0], [0, 0, 1, 0], [], []>} : vector<16x13xf32>, vector<8x13xf32>, vector<16x8xf32> -> vector<16x8xf32>
    %20 = vector.broadcast %2 : vector<16x1xf32> to vector<16x8xf32>
    %21 = arith.addf %19, %20 : vector<16x8xf32>
    %c0_i32 = arith.constant 0 : i32
    %22 = arith.cmpi eq, %arg0, %c0_i32 : i32
    %c0_i32_15 = arith.constant 0 : i32
    %23 = arith.cmpi eq, %arg1, %c0_i32_15 : i32
    %24 = arith.andi %22, %23 : i1
    %25 = arith.extui %24 : i1 to i32
    %c0_i32_16 = arith.constant 0 : i32
    %26 = arith.cmpi ne, %25, %c0_i32_16 : i32
    scf.if %26 {
      %cst_23 = arith.constant 0.000000e+00 : f32
      %36 = vector.broadcast %cst_23 : f32 to vector<16x1xf32>
      %c0_24 = arith.constant 0 : index
      %c0_25 = arith.constant 0 : index
      %37 = vector.load %arg5[%c0_24, %c0_25] : memref<16x1xf32, #tpu.memory_space<vmem>>, vector<16x1xf32>
      tpu.vector_store %arg5[%c0_24, %c0_25], %36 {strides = array<i32>} : memref<16x1xf32, #tpu.memory_space<vmem>>, vector<16x1xf32>,
      %cst_26 = arith.constant 0.000000e+00 : f32
      %38 = vector.broadcast %cst_26 : f32 to vector<16x1xf32>
      %c0_27 = arith.constant 0 : index
      %c0_28 = arith.constant 0 : index
      %39 = vector.load %arg6[%c0_27, %c0_28] : memref<16x1xf32, #tpu.memory_space<vmem>>, vector<16x1xf32>
      tpu.vector_store %arg6[%c0_27, %c0_28], %38 {strides = array<i32>} : memref<16x1xf32, #tpu.memory_space<vmem>>, vector<16x1xf32>,
      %cst_29 = arith.constant 0.000000e+00 : f32
      %40 = vector.broadcast %cst_29 : f32 to vector<8x1xf32>
      %c0_30 = arith.constant 0 : index
      %c0_31 = arith.constant 0 : index
      %41 = vector.load %arg7[%c0_30, %c0_31] : memref<8x1xf32, #tpu.memory_space<vmem>>, vector<8x1xf32>
      tpu.vector_store %arg7[%c0_30, %c0_31], %40 {strides = array<i32>} : memref<8x1xf32, #tpu.memory_space<vmem>>, vector<8x1xf32>,
      %cst_32 = arith.constant 0.000000e+00 : f32
      %42 = vector.broadcast %cst_32 : f32 to vector<8x1xf32>
      %c0_33 = arith.constant 0 : index
      %c0_34 = arith.constant 0 : index
      %43 = vector.load %arg8[%c0_33, %c0_34] : memref<8x1xf32, #tpu.memory_space<vmem>>, vector<8x1xf32>
      tpu.vector_store %arg8[%c0_33, %c0_34], %42 {strides = array<i32>} : memref<8x1xf32, #tpu.memory_space<vmem>>, vector<8x1xf32>,
    } else {
    }
    %c0_i32_17 = arith.constant 0 : i32
    %27 = arith.cmpi eq, %arg0, %c0_i32_17 : i32
    %28 = arith.extui %27 : i1 to i32
    %c0_i32_18 = arith.constant 0 : i32
    %29 = arith.cmpi ne, %28, %c0_i32_18 : i32
    scf.if %29 {
      %36 = vector.broadcast %17 : vector<1x8xf32> to vector<16x8xf32>
      %37 = arith.mulf %21, %36 : vector<16x8xf32>
      %c0_23 = arith.constant 0 : index
      %c0_24 = arith.constant 0 : index
      %38 = vector.load %arg5[%c0_23, %c0_24] : memref<16x1xf32, #tpu.memory_space<vmem>>, vector<16x1xf32>
      %cst_25 = arith.constant dense<0.000000e+00> : vector<16xf32>
      %39 = vector.multi_reduction <add>, %37, %cst_25 [1] : vector<16x8xf32> to vector<16xf32>
      %40 = vector.shape_cast %39 : vector<16xf32> to vector<16x1xf32>
      %41 = arith.addf %38, %40 : vector<16x1xf32>
      %c0_26 = arith.constant 0 : index
      %c0_27 = arith.constant 0 : index
      %42 = vector.load %arg5[%c0_26, %c0_27] : memref<16x1xf32, #tpu.memory_space<vmem>>, vector<16x1xf32>
      tpu.vector_store %arg5[%c0_26, %c0_27], %41 {strides = array<i32>} : memref<16x1xf32, #tpu.memory_space<vmem>>, vector<16x1xf32>,
      %c0_28 = arith.constant 0 : index
      %c0_29 = arith.constant 0 : index
      %43 = vector.load %arg6[%c0_28, %c0_29] : memref<16x1xf32, #tpu.memory_space<vmem>>, vector<16x1xf32>
      %44 = arith.mulf %37, %21 : vector<16x8xf32>
      %cst_30 = arith.constant dense<0.000000e+00> : vector<16xf32>
      %45 = vector.multi_reduction <add>, %44, %cst_30 [1] : vector<16x8xf32> to vector<16xf32>
      %46 = vector.shape_cast %45 : vector<16xf32> to vector<16x1xf32>
      %47 = arith.addf %43, %46 : vector<16x1xf32>
      %c0_31 = arith.constant 0 : index
      %c0_32 = arith.constant 0 : index
      %48 = vector.load %arg6[%c0_31, %c0_32] : memref<16x1xf32, #tpu.memory_space<vmem>>, vector<16x1xf32>
      tpu.vector_store %arg6[%c0_31, %c0_32], %47 {strides = array<i32>} : memref<16x1xf32, #tpu.memory_space<vmem>>, vector<16x1xf32>,
    } else {
    }
    %c1_i32 = arith.constant 1 : i32
    %30 = arith.cmpi eq, %arg0, %c1_i32 : i32
    %31 = arith.extui %30 : i1 to i32
    %cst_19 = arith.constant 1.250000e-01 : f32
    %c0_i32_20 = arith.constant 0 : i32
    %32 = arith.cmpi ne, %31, %c0_i32_20 : i32
    scf.if %32 {
      %c0_23 = arith.constant 0 : index
      %c0_24 = arith.constant 0 : index
      %36 = vector.load %arg5[%c0_23, %c0_24] : memref<16x1xf32, #tpu.memory_space<vmem>>, vector<16x1xf32>
      %c0_25 = arith.constant 0 : index
      %c0_26 = arith.constant 0 : index
      %37 = vector.load %arg6[%c0_25, %c0_26] : memref<16x1xf32, #tpu.memory_space<vmem>>, vector<16x1xf32>
      %38 = vector.broadcast %cst_19 : f32 to vector<16x1xf32>
      %39 = arith.mulf %36, %38 : vector<16x1xf32>
      %40 = vector.broadcast %cst_19 : f32 to vector<16x1xf32>
      %41 = arith.mulf %37, %40 : vector<16x1xf32>
      %42 = arith.mulf %39, %39 : vector<16x1xf32>
      %43 = arith.subf %41, %42 : vector<16x1xf32>
      %cst_27 = arith.constant 0.000000e+00 : f32
      %44 = vector.broadcast %cst_27 : f32 to vector<16x1xf32>
      %45 = arith.maximumf %43, %44 : vector<16x1xf32>
      %46 = vector.broadcast %39 : vector<16x1xf32> to vector<16x8xf32>
      %47 = arith.subf %21, %46 : vector<16x8xf32>
      %cst_28 = arith.constant 9.99999974E-6 : f32
      %48 = vector.broadcast %cst_28 : f32 to vector<16x1xf32>
      %49 = arith.addf %45, %48 : vector<16x1xf32>
      %50 = math.rsqrt %49 : vector<16x1xf32>
      %51 = vector.broadcast %50 : vector<16x1xf32> to vector<16x8xf32>
      %52 = arith.mulf %47, %51 : vector<16x8xf32>
      %53 = vector.broadcast %3 : vector<16x1xf32> to vector<16x8xf32>
      %54 = arith.mulf %52, %53 : vector<16x8xf32>
      %55 = vector.broadcast %4 : vector<16x1xf32> to vector<16x8xf32>
      %56 = arith.addf %54, %55 : vector<16x8xf32>
      %cst_29 = arith.constant 0.000000e+00 : f32
      %57 = vector.broadcast %cst_29 : f32 to vector<16x8xf32>
      %58 = arith.maximumf %56, %57 : vector<16x8xf32>
      %cst_30 = arith.constant dense<0.000000e+00> : vector<8x8xf32>
      %59 = tpu.matmul %1, %58, %cst_30 {dimension_numbers = #tpu.dot_dimension_numbers<[1], [0], [0], [1], [0, 0, 1, 1], [], []>} : vector<8x16xf32>, vector<16x8xf32>, vector<8x8xf32> -> vector<8x8xf32>
      %60 = vector.broadcast %5 : vector<8x1xf32> to vector<8x8xf32>
      %61 = arith.addf %59, %60 : vector<8x8xf32>
      %62 = vector.broadcast %17 : vector<1x8xf32> to vector<8x8xf32>
      %63 = arith.mulf %61, %62 : vector<8x8xf32>
      %c0_31 = arith.constant 0 : index
      %c0_32 = arith.constant 0 : index
      %64 = vector.load %arg7[%c0_31, %c0_32] : memref<8x1xf32, #tpu.memory_space<vmem>>, vector<8x1xf32>
      %cst_33 = arith.constant dense<0.000000e+00> : vector<8xf32>
      %65 = vector.multi_reduction <add>, %63, %cst_33 [1] : vector<8x8xf32> to vector<8xf32>
      %66 = vector.shape_cast %65 : vector<8xf32> to vector<8x1xf32>
      %67 = arith.addf %64, %66 : vector<8x1xf32>
      %c0_34 = arith.constant 0 : index
      %c0_35 = arith.constant 0 : index
      %68 = vector.load %arg7[%c0_34, %c0_35] : memref<8x1xf32, #tpu.memory_space<vmem>>, vector<8x1xf32>
      tpu.vector_store %arg7[%c0_34, %c0_35], %67 {strides = array<i32>} : memref<8x1xf32, #tpu.memory_space<vmem>>, vector<8x1xf32>,
      %c0_36 = arith.constant 0 : index
      %c0_37 = arith.constant 0 : index
      %69 = vector.load %arg8[%c0_36, %c0_37] : memref<8x1xf32, #tpu.memory_space<vmem>>, vector<8x1xf32>
      %70 = arith.mulf %63, %61 : vector<8x8xf32>
      %cst_38 = arith.constant dense<0.000000e+00> : vector<8xf32>
      %71 = vector.multi_reduction <add>, %70, %cst_38 [1] : vector<8x8xf32> to vector<8xf32>
      %72 = vector.shape_cast %71 : vector<8xf32> to vector<8x1xf32>
      %73 = arith.addf %69, %72 : vector<8x1xf32>
      %c0_39 = arith.constant 0 : index
      %c0_40 = arith.constant 0 : index
      %74 = vector.load %arg8[%c0_39, %c0_40] : memref<8x1xf32, #tpu.memory_space<vmem>>, vector<8x1xf32>
      tpu.vector_store %arg8[%c0_39, %c0_40], %73 {strides = array<i32>} : memref<8x1xf32, #tpu.memory_space<vmem>>, vector<8x1xf32>,
    } else {
    }
    %c2_i32 = arith.constant 2 : i32
    %33 = arith.cmpi eq, %arg0, %c2_i32 : i32
    %34 = arith.extui %33 : i1 to i32
    %cst_21 = arith.constant 1.250000e-01 : f32
    %c0_i32_22 = arith.constant 0 : i32
    %35 = arith.cmpi ne, %34, %c0_i32_22 : i32
    scf.if %35 {
      %c0_23 = arith.constant 0 : index
      %c0_24 = arith.constant 0 : index
      %36 = vector.load %arg5[%c0_23, %c0_24] : memref<16x1xf32, #tpu.memory_space<vmem>>, vector<16x1xf32>
      %c0_25 = arith.constant 0 : index
      %c0_26 = arith.constant 0 : index
      %37 = vector.load %arg6[%c0_25, %c0_26] : memref<16x1xf32, #tpu.memory_space<vmem>>, vector<16x1xf32>
      %38 = vector.broadcast %cst_21 : f32 to vector<16x1xf32>
      %39 = arith.mulf %36, %38 : vector<16x1xf32>
      %40 = vector.broadcast %cst_21 : f32 to vector<16x1xf32>
      %41 = arith.mulf %37, %40 : vector<16x1xf32>
      %42 = arith.mulf %39, %39 : vector<16x1xf32>
      %43 = arith.subf %41, %42 : vector<16x1xf32>
      %cst_27 = arith.constant 0.000000e+00 : f32
      %44 = vector.broadcast %cst_27 : f32 to vector<16x1xf32>
      %45 = arith.maximumf %43, %44 : vector<16x1xf32>
      %46 = vector.broadcast %39 : vector<16x1xf32> to vector<16x8xf32>
      %47 = arith.subf %21, %46 : vector<16x8xf32>
      %cst_28 = arith.constant 9.99999974E-6 : f32
      %48 = vector.broadcast %cst_28 : f32 to vector<16x1xf32>
      %49 = arith.addf %45, %48 : vector<16x1xf32>
      %50 = math.rsqrt %49 : vector<16x1xf32>
      %51 = vector.broadcast %50 : vector<16x1xf32> to vector<16x8xf32>
      %52 = arith.mulf %47, %51 : vector<16x8xf32>
      %53 = vector.broadcast %3 : vector<16x1xf32> to vector<16x8xf32>
      %54 = arith.mulf %52, %53 : vector<16x8xf32>
      %55 = vector.broadcast %4 : vector<16x1xf32> to vector<16x8xf32>
      %56 = arith.addf %54, %55 : vector<16x8xf32>
      %cst_29 = arith.constant 0.000000e+00 : f32
      %57 = vector.broadcast %cst_29 : f32 to vector<16x8xf32>
      %58 = arith.maximumf %56, %57 : vector<16x8xf32>
      %cst_30 = arith.constant dense<0.000000e+00> : vector<8x8xf32>
      %59 = tpu.matmul %1, %58, %cst_30 {dimension_numbers = #tpu.dot_dimension_numbers<[1], [0], [0], [1], [0, 0, 1, 1], [], []>} : vector<8x16xf32>, vector<16x8xf32>, vector<8x8xf32> -> vector<8x8xf32>
      %60 = vector.broadcast %5 : vector<8x1xf32> to vector<8x8xf32>
      %61 = arith.addf %59, %60 : vector<8x8xf32>
      %c0_31 = arith.constant 0 : index
      %c0_32 = arith.constant 0 : index
      %62 = vector.load %arg7[%c0_31, %c0_32] : memref<8x1xf32, #tpu.memory_space<vmem>>, vector<8x1xf32>
      %c0_33 = arith.constant 0 : index
      %c0_34 = arith.constant 0 : index
      %63 = vector.load %arg8[%c0_33, %c0_34] : memref<8x1xf32, #tpu.memory_space<vmem>>, vector<8x1xf32>
      %64 = vector.broadcast %cst_21 : f32 to vector<8x1xf32>
      %65 = arith.mulf %62, %64 : vector<8x1xf32>
      %66 = vector.broadcast %cst_21 : f32 to vector<8x1xf32>
      %67 = arith.mulf %63, %66 : vector<8x1xf32>
      %68 = arith.mulf %65, %65 : vector<8x1xf32>
      %69 = arith.subf %67, %68 : vector<8x1xf32>
      %cst_35 = arith.constant 0.000000e+00 : f32
      %70 = vector.broadcast %cst_35 : f32 to vector<8x1xf32>
      %71 = arith.maximumf %69, %70 : vector<8x1xf32>
      %72 = vector.broadcast %65 : vector<8x1xf32> to vector<8x8xf32>
      %73 = arith.subf %61, %72 : vector<8x8xf32>
      %cst_36 = arith.constant 9.99999974E-6 : f32
      %74 = vector.broadcast %cst_36 : f32 to vector<8x1xf32>
      %75 = arith.addf %71, %74 : vector<8x1xf32>
      %76 = math.rsqrt %75 : vector<8x1xf32>
      %77 = vector.broadcast %76 : vector<8x1xf32> to vector<8x8xf32>
      %78 = arith.mulf %73, %77 : vector<8x8xf32>
      %79 = vector.broadcast %6 : vector<8x1xf32> to vector<8x8xf32>
      %80 = arith.mulf %78, %79 : vector<8x8xf32>
      %81 = vector.broadcast %7 : vector<8x1xf32> to vector<8x8xf32>
      %82 = arith.addf %80, %81 : vector<8x8xf32>
      %cst_37 = arith.constant 0.000000e+00 : f32
      %83 = vector.broadcast %cst_37 : f32 to vector<8x8xf32>
      %84 = arith.maximumf %82, %83 : vector<8x8xf32>
      %85 = vector.broadcast %8 : vector<8x1xf32> to vector<8x8xf32>
      %86 = arith.mulf %85, %84 : vector<8x8xf32>
      %cst_38 = arith.constant dense<0.000000e+00> : vector<8xf32>
      %87 = vector.multi_reduction <add>, %86, %cst_38 [0] : vector<8x8xf32> to vector<8xf32>
      %88 = vector.shape_cast %87 : vector<8xf32> to vector<1x8xf32>
      %89 = vector.broadcast %9 : vector<1x1xf32> to vector<1x8xf32>
      %90 = arith.addf %88, %89 : vector<1x8xf32>
      %91 = arith.negf %90 : vector<1x8xf32>
      %92 = math.exp %91 : vector<1x8xf32>
      %cst_39 = arith.constant 1.000000e+00 : f32
      %93 = vector.broadcast %cst_39 : f32 to vector<1x8xf32>
      %94 = arith.addf %93, %92 : vector<1x8xf32>
      %95 = arith.divf %93, %94 : vector<1x8xf32>
      %c0_40 = arith.constant 0 : index
      %c0_41 = arith.constant 0 : index
      %96 = vector.load %arg4[%c0_40, %c0_41] : memref<1x8xf32, #tpu.memory_space<vmem>>, vector<1x8xf32>
      tpu.vector_store %arg4[%c0_40, %c0_41], %95 {strides = array<i32>} : memref<1x8xf32, #tpu.memory_space<vmem>>, vector<1x8xf32>,
    } else {
    }
    return
  }
  func.func @transform_0(%arg0: i32, %arg1: i32) -> (i32, i32) {
    %c0_i32 = arith.constant 0 : i32
    %c0_i32_0 = arith.constant 0 : i32
    return %arg1, %c0_i32 : i32, i32
  }
  func.func @transform_1(%arg0: i32, %arg1: i32) -> (i32, i32) {
    %c0_i32 = arith.constant 0 : i32
    %c0_i32_0 = arith.constant 0 : i32
    %c0_i32_1 = arith.constant 0 : i32
    return %c0_i32, %c0_i32_0 : i32, i32
  }
  func.func @transform_2(%arg0: i32, %arg1: i32) -> (i32, i32) {
    %c0_i32 = arith.constant 0 : i32
    %c0_i32_0 = arith.constant 0 : i32
    return %c0_i32, %arg1 : i32, i32
  }
}

</mosaic_0001>

<llo_original>
// kernel: tpu_custom_call.1
$region0: #{tpu_custom_call.1}
  #allocation0 [shape = 'u32[]', space=smem, size = 0x4, offset = 0x4, fixed_abs, tag = 'smem constant byte address 0x4 - core index']
  #allocation1 [shape = 'u32[144,128]{1,0:T(1,128)}', space=vmem, size = 0x12000, scoped, tag = 'internal scratch']
  #allocation2 [shape = 'f32[16,1]{1,0:T(8,128)}', space=vmem, size = 0x2000, scoped, tag = 'scratch operand']
  #allocation3 [shape = 'f32[16,1]{1,0:T(8,128)}', space=vmem, size = 0x2000, scoped, tag = 'scratch operand']
  #allocation4 [shape = 'f32[8,1]{1,0:T(8,128)}', space=vmem, size = 0x1000, scoped, tag = 'scratch operand']
  #allocation5 [shape = 'f32[8,1]{1,0:T(8,128)}', space=vmem, size = 0x1000, scoped, tag = 'scratch operand']
  %s0 = inlined_call_operand.vmem [shape: f32[8,13], index: 0, kind: input, shape index: {}]
  %s1 = inlined_call_operand.vmem [shape: f32[48,16], index: 1, kind: input, shape index: {}]
  %s2 = inlined_call_operand.hbm [shape: f32[1,8], index: 2, kind: output, shape index: {}]
  %s3 = sld [smem:[#allocation0]]
  $region57: #{tpu_custom_call.1} parent=0
    _
  %s5 = ssub.s32 1, %s3
  %s6 = scalar_select 0, %s5, %s3
  $region1: #{tpu_custom_call.1} parent=0
    #allocation6 [shape = 'u8[512]{0}', space=vmem, size = 0x400, scoped, tag = 'output window, operand 0, single buffered']
    #allocation7 [shape = 's32[2]{0}', space=sflag, size = 0x8, scoped, tag = 'scoped memory for tpu_custom_call.1']
    %7 = vsyncpa [#allocation7], 0
    loop: start=0, step=1, limit=5
    $region2: #{tpu_custom_call.1} parent=1 // loop_pre_header
      _
    $region3: #{tpu_custom_call.1} parent=1 // loop_header
      %s9 = sphi 0, %s13
      %p10 = scmp.ge.s32.totalorder %s9, 5
      %s16 = sphi 0, %s28
      %s17 = sphi 0, %s24
      %s18 = sphi 0, %s16
      %s19 = sphi 0, %s17
      %s20 = sphi 0, %s18
      %s21 = sphi 0, %s19
      %s31 = sphi 0, %s33
      %s34 = sphi 0, %s31
      %s35 = sphi 0, %s34
      %s51 = sphi 0, %s35
      %s55 = sphi 0, %s55
      %s57 = sphi 0, %s55
      %s58 = sphi 0, %s57
      %s72 = sphi 0, %s58
      %s78 = sphi 0, %s80
      %s81 = sphi 0, %s78
      %s82 = sphi 0, %s81
      %s98 = sphi 0, %s82
    $region4: #{tpu_custom_call.1} parent=1 // loop_header_branch
      %12 = sbr.rel (%p10) target = $region8
    $region5: #{tpu_custom_call.1} parent=1 // loop_body
      %s14 = ssub.s32 %s9, 1
      %s15 = ssub.s32 %s9, 2
      %s22 = sadd.s32 1, %s17
      %p23 = scmp.ge.s32.totalorder %s22, 1
      %s24 = scalar_select %p23, 0, %s22
      %s25 = sadd.s32 1, %s16
      %s26 = scalar_select %p23, %s25, %s16
      %p27 = scmp.ge.s32.totalorder %s26, 3
      %s28 = scalar_select %p27, 0, %s26
      %s29 = ssub.s32 %s17, %s24
      %p30 = scmp.eq.s32.totalorder %s29, 0
      %s32 = sadd.s32 %s31, 1
      %s33 = scalar_select %p30, %s31, %s32
      %p36 = pneg %p30
      %p37 = scmp.eq.s32.totalorder %s9, 2
      %p38 = por %p36, %p37
      %p39 = scmp.ne.s32.totalorder %s31, %s34
      %p40 = scmp.eq.s32.totalorder %s9, 0
      %p41 = por %p39, %p40
      %p42 = scmp.ne.s32.totalorder %s31, %s34
      %p43 = scmp.eq.s32.totalorder %s14, 2
      %p44 = por %p42, %p43
      %p45 = scmp.ne.s32.totalorder %s34, %s35
      %p46 = scmp.eq.s32.totalorder %s14, 0
      %p47 = por %p45, %p46
      %p48 = scmp.ne.s32.totalorder %s34, %s35
      %p49 = scmp.eq.s32.totalorder %s15, 2
      %p50 = por %p48, %p49
      %p52 = scmp.ne.s32.totalorder %s35, %s51
      %p53 = scmp.eq.s32.totalorder %s15, 0
      %p54 = por %p52, %p53
      %s56 = sadd.s32 %s55, 1
      %p59 = scmp.eq.s32.totalorder %s9, 2
      %p60 = scmp.ne.s32.totalorder %s55, %s57
      %p61 = scmp.eq.s32.totalorder %s9, 0
      %p62 = por %p60, %p61
      %p63 = scmp.ne.s32.totalorder %s55, %s57
      %p64 = scmp.eq.s32.totalorder %s14, 2
      %p65 = por %p63, %p64
      %p66 = scmp.ne.s32.totalorder %s57, %s58
      %p67 = scmp.eq.s32.totalorder %s14, 0
      %p68 = por %p66, %p67
      %p69 = scmp.ne.s32.totalorder %s57, %s58
      %p70 = scmp.eq.s32.totalorder %s15, 2
      %p71 = por %p69, %p70
      %p73 = scmp.ne.s32.totalorder %s58, %s72
      %p74 = scmp.eq.s32.totalorder %s15, 0
      %p75 = por %p73, %p74
      %s76 = ssub.s32 %s17, %s24
      %p77 = scmp.eq.s32.totalorder %s76, 0
      %s79 = sadd.s32 %s78, 1
      %s80 = scalar_select %p77, %s78, %s79
      %p83 = pneg %p77
      %p84 = scmp.eq.s32.totalorder %s9, 2
      %p85 = por %p83, %p84
      %p86 = scmp.ne.s32.totalorder %s78, %s81
      %p87 = scmp.eq.s32.totalorder %s9, 0
      %p88 = por %p86, %p87
      %p89 = scmp.ne.s32.totalorder %s78, %s81
      %p90 = scmp.eq.s32.totalorder %s14, 2
      %p91 = por %p89, %p90
      %p92 = scmp.ne.s32.totalorder %s81, %s82
      %p93 = scmp.eq.s32.totalorder %s14, 0
      %p94 = por %p92, %p93
      %p95 = scmp.ne.s32.totalorder %s81, %s82
      %p96 = scmp.eq.s32.totalorder %s15, 2
      %p97 = por %p95, %p96
      %p99 = scmp.ne.s32.totalorder %s82, %s98
      %p100 = scmp.eq.s32.totalorder %s15, 0
      %p101 = por %p99, %p100
      %p102 = scmp.le.s32.totalorder 1, %s9
      %p103 = scmp.lt.s32.totalorder %s9, 4
      %p104 = pnand %p102, %p103
      %p105 = pneg %p104
      // Predicated region
      $region9: #{tpu_custom_call.1} parent=5 // pred_check
        _
      $region10: #{tpu_custom_call.1} parent=5 // pred_check_branch
        %107 = sbr.rel (%p104) target = $region12
      $region11: #{tpu_custom_call.1} parent=5 // pred_region
        %s108 = ssub.s32 %s9, 1
        // Predicated region
        $region13: #{tpu_custom_call.1} parent=11 // pred_check
          %p109 = pneg %p47
        $region14: #{tpu_custom_call.1} parent=11 // pred_check_branch
          %111 = sbr.rel (%p109) target = $region16
        $region15: #{tpu_custom_call.1} parent=11 // pred_region
          %p112 = scmp.lt.s32.totalorder %s19, 0
          %s113 = scalar_select %p112, %s19, 0
          %s114 = smul.addr %s113, 8
          %s115 = scalar_lea.vmem %s0, %s114
        $region16: #{tpu_custom_call.1} parent=11 // pred_fallthru
          _
        // Predicated region
        $region17: #{tpu_custom_call.1} parent=11 // pred_check
          %p116 = pneg %p68
        $region18: #{tpu_custom_call.1} parent=11 // pred_check_branch
          %118 = sbr.rel (%p116) target = $region20
        $region19: #{tpu_custom_call.1} parent=11 // pred_region
          _
        $region20: #{tpu_custom_call.1} parent=11 // pred_fallthru
          _
      $region12: #{tpu_custom_call.1} parent=5 // pred_fallthru
        _
      %p119 = scmp.lt.s32.totalorder %s9, 3
      // Predicated region
      $region21: #{tpu_custom_call.1} parent=5 // pred_check
        %p120 = pneg %p119
      $region22: #{tpu_custom_call.1} parent=5 // pred_check_branch
        %122 = sbr.rel (%p120) target = $region24
      $region23: #{tpu_custom_call.1} parent=5 // pred_region
        _
      $region24: #{tpu_custom_call.1} parent=5 // pred_fallthru
        _
      %p123 = scmp.le.s32.totalorder 1, %s9
      %p124 = scmp.lt.s32.totalorder %s9, 4
      %p125 = pnand %p123, %p124
      %p126 = pneg %p125
      // Predicated region
      $region25: #{tpu_custom_call.1} parent=5 // pred_check
        _
      $region26: #{tpu_custom_call.1} parent=5 // pred_check_branch
        %128 = sbr.rel (%p125) target = $region28
      $region27: #{tpu_custom_call.1} parent=5 // pred_region
        %s129 = ssub.s32 %s9, 1
        %p130 = scmp.lt.s32.totalorder %s19, 0
        %s131 = scalar_select %p130, %s19, 0
        %s132 = smul.addr %s131, 8
        %s133 = scalar_lea.vmem %s0, %s132
        %p134 = pneg %p47
        %p135 = pneg %p44
        %p136 = pneg %p68
        %p137 = pneg %p65
        %p138 = pneg %p94
        %p139 = pneg %p91
        %p140 = scmp.lt.s32.totalorder %s19, 0
        %s141 = scalar_select %p140, %s19, 0
        %s142 = smul.addr %s141, 8
        %s143 = scalar_lea.vmem %s0, %s142
        %v144 = vld [vmem:[%s1] sm:$0xff]
        %v145 = vld [vmem:[%s1 + $0x8] sm:$0xff]
        %v146 = vld [vmem:[%s1 + $0x10] sm:$0xff]
        %v147 = vld [vmem:[%s1 + $0x18] sm:$0xff]
        %v148 = vld [vmem:[%s1 + $0x20] sm:$0xff]
        %v149 = vld [vmem:[%s1 + $0x28] sm:$0xff]
        %v150 = vld [vmem:[%s1 + $0x28] sm:$0x1]
        %v151 = vlaneseq
        %v152 = vand.u32 %v151, 127
        %s153 = smul.u32 %s19, 8
        %v154 = vstv %s153
        %v155 = vadd.s32 %v154, %v152
        %vm156 = vcmp.lt.s32.totalorder %v155, 8
        %v157 = vsel %vm156, 1, 0
        %v158 = vcvt.s32.f32 %v157
        %v159 = vld [vmem:[%s143] sm:$0xff]
        %161 = vset.pattern.permute.xlu0 0
        %162 = vperm.xlu0 %161, %v147
        %v163 = vpop.permute.xlu0 %162
        %166 = vset.pattern.permute.xlu0 0
        %167 = vperm.xlu0 %166, %v148
        %v168 = vpop.permute.xlu0 %167
        %vm170 = vcmask 105472
        %v172 = vsel %vm170, %v144, 0
        %v175 = vsel %vm170, %v145, 0
        %v178 = vsel %vm170, %v159, 0
        %180 = vmatprep.subr.mxu0 0.0
        %181 = vmatpush1.xpose.msra.mxu0 %v178
        %182 = vmatprep.subr.mxu0 0.0
        %183 = vmatpush1.xpose.msra.mxu0 0.0
        %184 = vmatprep.subr.mxu0 0.0
        %185 = vmatpush1.xpose.msra.mxu0 0.0
        %186 = vmatprep.subr.mxu0 0.0
        %187 = vmatpush1.xpose.msra.mxu0 0.0
        %188 = vmatprep.subr.mxu0 0.0
        %189 = vmatpush1.xpose.msra.mxu0 0.0
        %190 = vmatprep.subr.mxu0 0.0
        %191 = vmatpush1.xpose.msra.mxu0 0.0
        %192 = vmatprep.subr.mxu0 0.0
        %193 = vmatpush1.xpose.msra.mxu0 0.0
        %194 = vmatprep.subr.mxu0 0.0
        %195 = vmatpush1.xpose.msra.mxu0 0.0
        %196 = vmatprep.subr.mxu0 0.0
        %197 = vmatpush1.xpose.msra.mxu0 0.0
        %198 = vmatprep.subr.mxu0 0.0
        %199 = vmatpush1.xpose.msra.mxu0 0.0
        %200 = vmatprep.subr.mxu0 0.0
        %201 = vmatpush1.xpose.msra.mxu0 0.0
        %202 = vmatprep.subr.mxu0 0.0
        %203 = vmatpush1.xpose.msra.mxu0 0.0
        %204 = vmatprep.subr.mxu0 0.0
        %205 = vmatpush1.xpose.msra.mxu0 0.0
        %206 = vmatprep.subr.mxu0 0.0
        %207 = vmatpush1.xpose.msra.mxu0 0.0
        %208 = vmatprep.subr.mxu0 0.0
        %209 = vmatpush1.xpose.msra.mxu0 0.0
        %210 = vmatprep.subr.mxu0 0.0
        %211 = vmatpush1.xpose.msra.mxu0 0.0
        %212 = vmatprep.subr.mxu0 0.0
        %213 = vmatpush1.xpose.msra.mxu0 0.0
        %214 = vmatprep.subr.mxu0 0.0
        %215 = vmatpush1.xpose.msra.mxu0 0.0
        %216 = vmatprep.subr.mxu0 0.0
        %217 = vmatpush1.xpose.msra.mxu0 0.0
        %218 = vmatprep.subr.mxu0 0.0
        %219 = vmatpush1.xpose.msra.mxu0 0.0
        %220 = vmatprep.subr.mxu0 0.0
        %221 = vmatpush1.xpose.msra.mxu0 0.0
        %222 = vmatprep.subr.mxu0 0.0
        %223 = vmatpush1.xpose.msra.mxu0 0.0
        %224 = vmatprep.subr.mxu0 0.0
        %225 = vmatpush1.xpose.msra.mxu0 0.0
        %226 = vmatprep.subr.mxu0 0.0
        %227 = vmatpush1.xpose.msra.mxu0 0.0
        %228 = vmatprep.subr.mxu0 0.0
        %229 = vmatpush1.xpose.msra.mxu0 0.0
        %230 = vmatprep.subr.mxu0 0.0
        %231 = vmatpush1.xpose.msra.mxu0 0.0
        %232 = vmatprep.subr.mxu0 0.0
        %233 = vmatpush1.xpose.msra.mxu0 0.0
        %234 = vmatprep.subr.mxu0 0.0
        %235 = vmatpush1.xpose.msra.mxu0 0.0
        %236 = vmatprep.subr.mxu0 0.0
        %237 = vmatpush1.xpose.msra.mxu0 0.0
        %238 = vmatprep.subr.mxu0 0.0
        %239 = vmatpush1.xpose.msra.mxu0 0.0
        %240 = vmatprep.subr.mxu0 0.0
        %241 = vmatpush1.xpose.msra.mxu0 0.0
        %242 = vmatprep.subr.mxu0 0.0
        %243 = vmatpush1.xpose.msra.mxu0 0.0
        %244 = vmatprep.mubr.f32.mxu0 0.0
        %245 = vmatmul.mubr.f32.gmra.mrb[0].mxu0 %v172
        %v246 = vpop.f32.mrb[0].mxu0
        %v247 = vadd.f32 %v163, %v246
        %v248 = vpop.f32.mrb[0].mxu0
        %249 = vmatprep.mubr.f32.mxu0 0.0
        %250 = vmatmul.mubr.f32.gmra.mrb[0].mxu0 %v175
        %v251 = vpop.f32.mrb[0].mxu0
        %v252 = vadd.f32 %v168, %v251
        %v253 = vpop.f32.mrb[0].mxu0
        %254 = vdwg.mxu0
        %p255 = scmp.eq.s32.totalorder %s18, 0
        %p256 = scmp.eq.s32.totalorder %s19, 0
        %p257 = pnand %p255, %p256
        %p258 = pneg %p257
        // Predicated region
        $region29: #{tpu_custom_call.1} parent=27 // pred_check
          _
        $region30: #{tpu_custom_call.1} parent=27 // pred_check_branch
          %260 = sbr.rel (%p257) target = $region32
        $region31: #{tpu_custom_call.1} parent=27 // pred_region
          %vm261 = vcmask 7168
          %262 = vst.msk [vmem:[#allocation2] sm:$0xff] %vm261, 0.0
          %263 = vst.msk [vmem:[#allocation2 + $0x8] sm:$0xff] %vm261, 0.0
          %264 = vst.msk [vmem:[#allocation3] sm:$0xff] %vm261, 0.0
          %265 = vst.msk [vmem:[#allocation3 + $0x8] sm:$0xff] %vm261, 0.0
          %266 = vst.msk [vmem:[#allocation4] sm:$0xff] %vm261, 0.0
          %267 = vst.msk [vmem:[#allocation5] sm:$0xff] %vm261, 0.0
        $region32: #{tpu_custom_call.1} parent=27 // pred_fallthru
          _
        // Predicated region
        $region33: #{tpu_custom_call.1} parent=27 // pred_check
          %p268 = pneg %p255
        $region34: #{tpu_custom_call.1} parent=27 // pred_check_branch
          %270 = sbr.rel (%p268) target = $region36
        $region35: #{tpu_custom_call.1} parent=27 // pred_region
          %v271 = vmul.f32 %v247, %v158
          %v272 = vmul.f32 %v252, %v158
          %v273 = vld [vmem:[#allocation2] sm:$0xff]
          %v274 = vld [vmem:[#allocation2 + $0x8] sm:$0xff]
          %vm275 = vcmask 64512
          %v276 = vsel %vm275, %v271, 0.0
          %277 = vadd.xlane.f32.xlu0 %v276
          %v278 = vpop.xlane.xlu0 %277
          %v279 = vsel %vm275, %v272, 0.0
          %280 = vadd.xlane.f32.xlu0 %v279
          %v281 = vpop.xlane.xlu0 %280
          %v282 = vadd.f32 %v273, %v278
          %v283 = vadd.f32 %v274, %v281
          %vm284 = vcmask 7168
          %285 = vst.msk [vmem:[#allocation2] sm:$0xff] %vm284, %v282
          %286 = vst.msk [vmem:[#allocation2 + $0x8] sm:$0xff] %vm284, %v283
          %v287 = vld [vmem:[#allocation3] sm:$0xff]
          %v288 = vld [vmem:[#allocation3 + $0x8] sm:$0xff]
          %v289 = vmul.f32 %v271, %v247
          %v290 = vmul.f32 %v272, %v252
          %v291 = vsel %vm275, %v289, 0.0
          %292 = vadd.xlane.f32.xlu0 %v291
          %v293 = vpop.xlane.xlu0 %292
          %v294 = vsel %vm275, %v290, 0.0
          %295 = vadd.xlane.f32.xlu0 %v294
          %v296 = vpop.xlane.xlu0 %295
          %v297 = vadd.f32 %v287, %v293
          %v298 = vadd.f32 %v288, %v296
          %299 = vst.msk [vmem:[#allocation3] sm:$0xff] %vm284, %v297
          %300 = vst.msk [vmem:[#allocation3 + $0x8] sm:$0xff] %vm284, %v298
        $region36: #{tpu_custom_call.1} parent=27 // pred_fallthru
          _
        %p301 = scmp.eq.s32.totalorder %s18, 1
        // Predicated region
        $region37: #{tpu_custom_call.1} parent=27 // pred_check
          %p302 = pneg %p301
        $region38: #{tpu_custom_call.1} parent=27 // pred_check_branch
          %304 = sbr.rel (%p302) target = $region40
        $region39: #{tpu_custom_call.1} parent=27 // pred_region
          %v305 = vld [vmem:[#allocation2] sm:$0xff]
          %v306 = vld [vmem:[#allocation2 + $0x8] sm:$0xff]
          %v307 = vld [vmem:[#allocation3] sm:$0xff]
          %v308 = vld [vmem:[#allocation3 + $0x8] sm:$0xff]
          %v309 = vmul.f32 %v305, 0.125
          %v310 = vmul.f32 %v306, 0.125
          %v311 = vmul.f32 %v307, 0.125
          %v312 = vmul.f32 %v308, 0.125
          %v313 = vmul.f32 %v309, %v309
          %v314 = vmul.f32 %v310, %v310
          %v315 = vsub.f32 %v311, %v313
          %v316 = vsub.f32 %v312, %v314
          %v317 = vmax.f32 %v315, 0.0
          %v318 = vmax.f32 %v316, 0.0
          %320 = vset.pattern.permute.xlu0 0
          %321 = vperm.xlu0 %320, %v309
          %v322 = vpop.permute.xlu0 %321
          %325 = vset.pattern.permute.xlu0 0
          %326 = vperm.xlu0 %325, %v310
          %v327 = vpop.permute.xlu0 %326
          %v329 = vsub.f32 %v247, %v322
          %v330 = vsub.f32 %v252, %v327
          %v331 = vadd.f32 %v317, 1e-05
          %v332 = vadd.f32 %v318, 1e-05
          %v333 = vrsqrt.pop %v331
          %v334 = vrsqrt.pop %v332
          %336 = vset.pattern.permute.xlu0 0
          %337 = vperm.xlu0 %336, %v333
          %v338 = vpop.permute.xlu0 %337
          %341 = vset.pattern.permute.xlu0 0
          %342 = vperm.xlu0 %341, %v334
          %v343 = vpop.permute.xlu0 %342
          %v345 = vmul.f32 %v329, %v338
          %v346 = vmul.f32 %v330, %v343
          %347 = vset.pattern.permute.xlu0 1
          %348 = vperm.xlu0 %347, %v147
          %v349 = vpop.permute.xlu0 %348
          %351 = vset.pattern.permute.xlu0 1
          %352 = vperm.xlu0 %351, %v148
          %v353 = vpop.permute.xlu0 %352
          %v355 = vmul.f32 %v345, %v349
          %v356 = vmul.f32 %v346, %v353
          %357 = vset.pattern.permute.xlu0 2
          %358 = vperm.xlu0 %357, %v147
          %v359 = vpop.permute.xlu0 %358
          %361 = vset.pattern.permute.xlu0 2
          %362 = vperm.xlu0 %361, %v148
          %v363 = vpop.permute.xlu0 %362
          %v365 = vadd.f32 %v355, %v359
          %v366 = vadd.f32 %v356, %v363
          %v367 = vmax.f32 %v365, 0.0
          %v368 = vmax.f32 %v366, 0.0
          %370 = vset.pattern.permute.xlu0 0
          %371 = vperm.xlu0 %370, %v149
          %v372 = vpop.permute.xlu0 %371
          %vm374 = vcmask 130048
          %v376 = vsel %vm374, %v146, 0
          %378 = vmatprep.subr.mxu0 0.0
          %379 = vmatpush1.msra.mxu0 %v367
          %380 = vmatprep.subr.mxu0 0.0
          %381 = vmatpush1.msra.mxu0 %v368
          %382 = vmatprep.subr.mxu0 0.0
          %383 = vmatpush1.msra.mxu0 0.0
          %384 = vmatprep.subr.mxu0 0.0
          %385 = vmatpush1.msra.mxu0 0.0
          %386 = vmatprep.subr.mxu0 0.0
          %387 = vmatpush1.msra.mxu0 0.0
          %388 = vmatprep.subr.mxu0 0.0
          %389 = vmatpush1.msra.mxu0 0.0
          %390 = vmatprep.subr.mxu0 0.0
          %391 = vmatpush1.msra.mxu0 0.0
          %392 = vmatprep.subr.mxu0 0.0
          %393 = vmatpush1.msra.mxu0 0.0
          %394 = vmatprep.subr.mxu0 0.0
          %395 = vmatpush1.msra.mxu0 0.0
          %396 = vmatprep.subr.mxu0 0.0
          %397 = vmatpush1.msra.mxu0 0.0
          %398 = vmatprep.subr.mxu0 0.0
          %399 = vmatpush1.msra.mxu0 0.0
          %400 = vmatprep.subr.mxu0 0.0
          %401 = vmatpush1.msra.mxu0 0.0
          %402 = vmatprep.subr.mxu0 0.0
          %403 = vmatpush1.msra.mxu0 0.0
          %404 = vmatprep.subr.mxu0 0.0
          %405 = vmatpush1.msra.mxu0 0.0
          %406 = vmatprep.subr.mxu0 0.0
          %407 = vmatpush1.msra.mxu0 0.0
          %408 = vmatprep.subr.mxu0 0.0
          %409 = vmatpush1.msra.mxu0 0.0
          %410 = vmatprep.subr.mxu0 0.0
          %411 = vmatpush1.msra.mxu0 0.0
          %412 = vmatprep.subr.mxu0 0.0
          %413 = vmatpush1.msra.mxu0 0.0
          %414 = vmatprep.subr.mxu0 0.0
          %415 = vmatpush1.msra.mxu0 0.0
          %416 = vmatprep.subr.mxu0 0.0
          %417 = vmatpush1.msra.mxu0 0.0
          %418 = vmatprep.subr.mxu0 0.0
          %419 = vmatpush1.msra.mxu0 0.0
          %420 = vmatprep.subr.mxu0 0.0
          %421 = vmatpush1.msra.mxu0 0.0
          %422 = vmatprep.subr.mxu0 0.0
          %423 = vmatpush1.msra.mxu0 0.0
          %424 = vmatprep.subr.mxu0 0.0
          %425 = vmatpush1.msra.mxu0 0.0
          %426 = vmatprep.subr.mxu0 0.0
          %427 = vmatpush1.msra.mxu0 0.0
          %428 = vmatprep.subr.mxu0 0.0
          %429 = vmatpush1.msra.mxu0 0.0
          %430 = vmatprep.subr.mxu0 0.0
          %431 = vmatpush1.msra.mxu0 0.0
          %432 = vmatprep.subr.mxu0 0.0
          %433 = vmatpush1.msra.mxu0 0.0
          %434 = vmatprep.subr.mxu0 0.0
          %435 = vmatpush1.msra.mxu0 0.0
          %436 = vmatprep.subr.mxu0 0.0
          %437 = vmatpush1.msra.mxu0 0.0
          %438 = vmatprep.subr.mxu0 0.0
          %439 = vmatpush1.msra.mxu0 0.0
          %440 = vmatprep.subr.mxu0 0.0
          %441 = vmatpush1.msra.mxu0 0.0
          %442 = vmatprep.mubr.f32.mxu0 0.0
          %443 = vmatmul.mubr.f32.gmra.mrb[0].mxu0 %v376
          %v444 = vpop.f32.mrb[0].mxu0
          %v445 = vadd.f32 %v372, %v444
          %v446 = vpop.f32.mrb[0].mxu0
          %447 = vdwg.mxu0
          %v448 = vmul.f32 %v445, %v158
          %v449 = vld [vmem:[#allocation4] sm:$0xff]
          %vm450 = vcmask 64512
          %v451 = vsel %vm450, %v448, 0.0
          %452 = vadd.xlane.f32.xlu0 %v451
          %v453 = vpop.xlane.xlu0 %452
          %v454 = vadd.f32 %v449, %v453
          %vm455 = vcmask 7168
          %456 = vst.msk [vmem:[#allocation4] sm:$0xff] %vm455, %v454
          %v457 = vld [vmem:[#allocation5] sm:$0xff]
          %v458 = vmul.f32 %v448, %v445
          %v459 = vsel %vm450, %v458, 0.0
          %460 = vadd.xlane.f32.xlu0 %v459
          %v461 = vpop.xlane.xlu0 %460
          %v462 = vadd.f32 %v457, %v461
          %463 = vst.msk [vmem:[#allocation5] sm:$0xff] %vm455, %v462
        $region40: #{tpu_custom_call.1} parent=27 // pred_fallthru
          _
        %p464 = scmp.eq.s32.totalorder %s18, 2
        // Predicated region
        $region41: #{tpu_custom_call.1} parent=27 // pred_check
          %p465 = pneg %p464
        $region42: #{tpu_custom_call.1} parent=27 // pred_check_branch
          %467 = sbr.rel (%p465) target = $region44
        $region43: #{tpu_custom_call.1} parent=27 // pred_region
          %v468 = vld [vmem:[#allocation2] sm:$0xff]
          %v469 = vld [vmem:[#allocation2 + $0x8] sm:$0xff]
          %v470 = vld [vmem:[#allocation3] sm:$0xff]
          %v471 = vld [vmem:[#allocation3 + $0x8] sm:$0xff]
          %v472 = vmul.f32 %v468, 0.125
          %v473 = vmul.f32 %v469, 0.125
          %v474 = vmul.f32 %v470, 0.125
          %v475 = vmul.f32 %v471, 0.125
          %v476 = vmul.f32 %v472, %v472
          %v477 = vmul.f32 %v473, %v473
          %v478 = vsub.f32 %v474, %v476
          %v479 = vsub.f32 %v475, %v477
          %v480 = vmax.f32 %v478, 0.0
          %v481 = vmax.f32 %v479, 0.0
          %483 = vset.pattern.permute.xlu0 0
          %484 = vperm.xlu0 %483, %v472
          %v485 = vpop.permute.xlu0 %484
          %488 = vset.pattern.permute.xlu0 0
          %489 = vperm.xlu0 %488, %v473
          %v490 = vpop.permute.xlu0 %489
          %v492 = vsub.f32 %v247, %v485
          %v493 = vsub.f32 %v252, %v490
          %v494 = vadd.f32 %v480, 1e-05
          %v495 = vadd.f32 %v481, 1e-05
          %v496 = vrsqrt.pop %v494
          %v497 = vrsqrt.pop %v495
          %499 = vset.pattern.permute.xlu0 0
          %500 = vperm.xlu0 %499, %v496
          %v501 = vpop.permute.xlu0 %500
          %504 = vset.pattern.permute.xlu0 0
          %505 = vperm.xlu0 %504, %v497
          %v506 = vpop.permute.xlu0 %505
          %v508 = vmul.f32 %v492, %v501
          %v509 = vmul.f32 %v493, %v506
          %510 = vset.pattern.permute.xlu0 1
          %511 = vperm.xlu0 %510, %v147
          %v512 = vpop.permute.xlu0 %511
          %514 = vset.pattern.permute.xlu0 1
          %515 = vperm.xlu0 %514, %v148
          %v516 = vpop.permute.xlu0 %515
          %v518 = vmul.f32 %v508, %v512
          %v519 = vmul.f32 %v509, %v516
          %520 = vset.pattern.permute.xlu0 2
          %521 = vperm.xlu0 %520, %v147
          %v522 = vpop.permute.xlu0 %521
          %524 = vset.pattern.permute.xlu0 2
          %525 = vperm.xlu0 %524, %v148
          %v526 = vpop.permute.xlu0 %525
          %v528 = vadd.f32 %v518, %v522
          %v529 = vadd.f32 %v519, %v526
          %v530 = vmax.f32 %v528, 0.0
          %v531 = vmax.f32 %v529, 0.0
          %533 = vset.pattern.permute.xlu0 0
          %534 = vperm.xlu0 %533, %v149
          %v535 = vpop.permute.xlu0 %534
          %vm537 = vcmask 130048
          %v539 = vsel %vm537, %v146, 0
          %541 = vmatprep.subr.mxu0 0.0
          %542 = vmatpush1.msra.mxu0 %v530
          %543 = vmatprep.subr.mxu0 0.0
          %544 = vmatpush1.msra.mxu0 %v531
          %545 = vmatprep.subr.mxu0 0.0
          %546 = vmatpush1.msra.mxu0 0.0
          %547 = vmatprep.subr.mxu0 0.0
          %548 = vmatpush1.msra.mxu0 0.0
          %549 = vmatprep.subr.mxu0 0.0
          %550 = vmatpush1.msra.mxu0 0.0
          %551 = vmatprep.subr.mxu0 0.0
          %552 = vmatpush1.msra.mxu0 0.0
          %553 = vmatprep.subr.mxu0 0.0
          %554 = vmatpush1.msra.mxu0 0.0
          %555 = vmatprep.subr.mxu0 0.0
          %556 = vmatpush1.msra.mxu0 0.0
          %557 = vmatprep.subr.mxu0 0.0
          %558 = vmatpush1.msra.mxu0 0.0
          %559 = vmatprep.subr.mxu0 0.0
          %560 = vmatpush1.msra.mxu0 0.0
          %561 = vmatprep.subr.mxu0 0.0
          %562 = vmatpush1.msra.mxu0 0.0
          %563 = vmatprep.subr.mxu0 0.0
          %564 = vmatpush1.msra.mxu0 0.0
          %565 = vmatprep.subr.mxu0 0.0
          %566 = vmatpush1.msra.mxu0 0.0
          %567 = vmatprep.subr.mxu0 0.0
          %568 = vmatpush1.msra.mxu0 0.0
          %569 = vmatprep.subr.mxu0 0.0
          %570 = vmatpush1.msra.mxu0 0.0
          %571 = vmatprep.subr.mxu0 0.0
          %572 = vmatpush1.msra.mxu0 0.0
          %573 = vmatprep.subr.mxu0 0.0
          %574 = vmatpush1.msra.mxu0 0.0
          %575 = vmatprep.subr.mxu0 0.0
          %576 = vmatpush1.msra.mxu0 0.0
          %577 = vmatprep.subr.mxu0 0.0
          %578 = vmatpush1.msra.mxu0 0.0
          %579 = vmatprep.subr.mxu0 0.0
          %580 = vmatpush1.msra.mxu0 0.0
          %581 = vmatprep.subr.mxu0 0.0
          %582 = vmatpush1.msra.mxu0 0.0
          %583 = vmatprep.subr.mxu0 0.0
          %584 = vmatpush1.msra.mxu0 0.0
          %585 = vmatprep.subr.mxu0 0.0
          %586 = vmatpush1.msra.mxu0 0.0
          %587 = vmatprep.subr.mxu0 0.0
          %588 = vmatpush1.msra.mxu0 0.0
          %589 = vmatprep.subr.mxu0 0.0
          %590 = vmatpush1.msra.mxu0 0.0
          %591 = vmatprep.subr.mxu0 0.0
          %592 = vmatpush1.msra.mxu0 0.0
          %593 = vmatprep.subr.mxu0 0.0
          %594 = vmatpush1.msra.mxu0 0.0
          %595 = vmatprep.subr.mxu0 0.0
          %596 = vmatpush1.msra.mxu0 0.0
          %597 = vmatprep.subr.mxu0 0.0
          %598 = vmatpush1.msra.mxu0 0.0
          %599 = vmatprep.subr.mxu0 0.0
          %600 = vmatpush1.msra.mxu0 0.0
          %601 = vmatprep.subr.mxu0 0.0
          %602 = vmatpush1.msra.mxu0 0.0
          %603 = vmatprep.subr.mxu0 0.0
          %604 = vmatpush1.msra.mxu0 0.0
          %605 = vmatprep.mubr.f32.mxu0 0.0
          %606 = vmatmul.mubr.f32.gmra.mrb[0].mxu0 %v539
          %v607 = vpop.f32.mrb[0].mxu0
          %v608 = vadd.f32 %v535, %v607
          %v609 = vpop.f32.mrb[0].mxu0
          %610 = vdwg.mxu0
          %v611 = vld [vmem:[#allocation4] sm:$0xff]
          %v612 = vld [vmem:[#allocation5] sm:$0xff]
          %v613 = vmul.f32 %v611, 0.125
          %v614 = vmul.f32 %v612, 0.125
          %v615 = vmul.f32 %v613, %v613
          %v616 = vsub.f32 %v614, %v615
          %v617 = vmax.f32 %v616, 0.0
          %619 = vset.pattern.permute.xlu0 0
          %620 = vperm.xlu0 %619, %v613
          %v621 = vpop.permute.xlu0 %620
          %v623 = vsub.f32 %v608, %v621
          %v624 = vadd.f32 %v617, 1e-05
          %v625 = vrsqrt.pop %v624
          %627 = vset.pattern.permute.xlu0 0
          %628 = vperm.xlu0 %627, %v625
          %v629 = vpop.permute.xlu0 %628
          %v631 = vmul.f32 %v623, %v629
          %632 = vset.pattern.permute.xlu0 1
          %633 = vperm.xlu0 %632, %v149
          %v634 = vpop.permute.xlu0 %633
          %v636 = vmul.f32 %v631, %v634
          %637 = vset.pattern.permute.xlu0 2
          %638 = vperm.xlu0 %637, %v149
          %v639 = vpop.permute.xlu0 %638
          %v641 = vadd.f32 %v636, %v639
          %v642 = vmax.f32 %v641, 0.0
          %643 = vset.pattern.permute.xlu0 3
          %644 = vperm.xlu0 %643, %v149
          %v645 = vpop.permute.xlu0 %644
          %v647 = vmul.f32 %v645, %v642
          %vm648 = vcmask 64512
          %v649 = vsel %vm648, %v647, 0.0
          %v650 = vrot.slane %v649, 4
          %v651 = vadd.f32 %v649, %v650
          %v652 = vrot.slane %v651, 2
          %v653 = vadd.f32 %v651, %v652
          %v654 = vrot.slane %v653, 1
          %v655 = vadd.f32 %v653, %v654
          %657 = vset.pattern.permute.xlu0 4
          %658 = vperm.xlu0 %657, %v150
          %v659 = vpop.permute.xlu0 %658
          %v661 = vadd.f32 %v655, %v659
          %v662 = vxor.u32 %v661, 2147483648
          %v663 = vmul.f32 %v662, 1.442695
          %v664 = vpow.pop %v663
          %v665 = vadd.f32 %v664, 1.0
          %v666 = vrcp.pop %v665
          %v667 = vmul.f32 1.0, %v666
          %vm668 = vcmask 57344
          %669 = vst.msk [vmem:[#allocation6] sm:$0x1] %vm668, %v667
        $region44: #{tpu_custom_call.1} parent=27 // pred_fallthru
          _
        // Predicated region
        $region45: #{tpu_custom_call.1} parent=27 // pred_check
          %p670 = pneg %p91
        $region46: #{tpu_custom_call.1} parent=27 // pred_check_branch
          %672 = sbr.rel (%p670) target = $region48
        $region47: #{tpu_custom_call.1} parent=27 // pred_region
          %s674 = ssub.s32 16, 16
          %675 = vsyncadd [#allocation7], %s674
          %s676 = smul.addr %s19, 16
          %s677 = scalar_lea.hbm %s2, %s676
          %s679 = sshll.u32 [#allocation6], 4
          %s680 = int_to_ptr.vmem [resolvable:$true] %s679
          %682 = dma.vmem_to_hbm [thread:$0]  %s680, 16, %s677, [#allocation7]
        $region48: #{tpu_custom_call.1} parent=27 // pred_fallthru
          _
        // Predicated region
        $region49: #{tpu_custom_call.1} parent=27 // pred_check
          %p683 = pneg %p91
        $region50: #{tpu_custom_call.1} parent=27 // pred_check_branch
          %685 = sbr.rel (%p683) target = $region52
        $region51: #{tpu_custom_call.1} parent=27 // pred_region
          %686 = dma.done [#allocation7], 16
        $region52: #{tpu_custom_call.1} parent=27 // pred_fallthru
          _
      $region28: #{tpu_custom_call.1} parent=5 // pred_fallthru
        _
      %p687 = scmp.le.s32.totalorder 2, %s9
      // Predicated region
      $region53: #{tpu_custom_call.1} parent=5 // pred_check
        %p688 = pneg %p687
      $region54: #{tpu_custom_call.1} parent=5 // pred_check_branch
        %690 = sbr.rel (%p688) target = $region56
      $region55: #{tpu_custom_call.1} parent=5 // pred_region
        %s691 = ssub.s32 %s9, 2
      $region56: #{tpu_custom_call.1} parent=5 // pred_fallthru
        _
    $region6: #{tpu_custom_call.1} parent=1 // loop_footer
      %s13 = sadd.s32 1, %s9
    $region7: #{tpu_custom_call.1} parent=1 // loop_footer_branch
      %8 = sbr.rel target = $region3
    $region8: #{tpu_custom_call.1} parent=1 // loop_exit
      _
    %692 = vsyncpa [#allocation7], 1
    %s693 = scalar_lea.sflag [#allocation7], 1
    %694 = vsyncpa %s693, 1

</llo_original>
